<compile_context>
chip_gen: v7x
topology: tpu7x:2x2x1
jax: 0.10.0
libtpu: 0.0.40
codegen_flags: <defaults>
</compile_context>

<pallas_src>
import numpy as np
import jax
import jax.numpy as jnp
from jax.experimental import pallas as pl
from jax.experimental.pallas import tpu as pltpu


def build_grid(resolution):
    """JAX/numpy port of the PyTorch build_grid: returns (1, H, W, 4) float32."""
    ranges = [np.linspace(0.0, 1.0, num=res) for res in resolution]
    grid = np.meshgrid(*ranges, sparse=False, indexing="ij")
    grid = np.stack(grid, axis=-1)
    grid = np.reshape(grid, [resolution[0], resolution[1], -1])
    grid = np.expand_dims(grid, axis=0).astype(np.float32)
    return jnp.asarray(np.concatenate([grid, 1.0 - grid], axis=-1))


def _add_pos_emb_kernel(x_ref, emb_ref, o_ref):
    # x_ref:   (TR, L)  one batch's row-tile (batch dim squeezed by BlockSpec)
    # emb_ref: (TR, L)  matching row-tile of the precomputed embedding
    # o_ref:   (TR, L)  output = x + emb   (plain 2-D add, no broadcast)
    o_ref[...] = (x_ref[...] + emb_ref[...]).astype(o_ref.dtype)


def _pick_lane_width(n, max_lanes=2048):
    """Largest divisor of n that is a multiple of 128 and <= max_lanes."""
    best = None
    for lanes in range(128, min(n, max_lanes) + 1, 128):
        if n % lanes == 0:
            best = lanes
    return best


def _round_up(x, m):
    return ((x + m - 1) // m) * m


def soft_position_embed(inputs, grid, weight, bias):
    """inputs: (B, H, W, C); grid: (1, H, W, 4); weight: (4, C); bias: (C,)."""
    B, H, W, C = inputs.shape
    HW = H * W
    N = HW * C
    dtype = inputs.dtype
    itemsize = jnp.dtype(dtype).itemsize

    # Batch-invariant embedding: computed exactly once, outside the hot loop,
    # in f32 for accuracy, then matched to the activation dtype (keeps the
    # resident/double-buffered emb tile the same size as an x tile).
    emb = (jnp.dot(grid.reshape(HW, 4), weight,
                   preferred_element_type=jnp.float32) + bias[None, :])
    emb = emb.astype(dtype)

    # Lane-dense flattening: per-batch (H, W, C) -> (R, L), L multiple of 128.
    L = _pick_lane_width(N)
    if L is None:
        # No exact divisor: pad the flat length up to R*L (full-width unmasked
        # stores, bounded tiles) and slice the pad off after the call.
        L = min(2048, _round_up(N, 128))
    R = pl.cdiv(N, L)
    N_pad = R * L

    # Native sublane multiple per dtype: 8 (f32) / 16 (bf16) / 32 (int8/fp8).
    sub = max(8, 32 // itemsize)

    # Row tile: target ~4 MiB blocks.  Total live VMEM = 2x(x) + 2x(out) +
    # 2x(emb) blocks, all in inputs.dtype -> <= ~24 MiB, safe on v7x (64 MiB
    # physical) and well under v5e/v6e once the scoped limit is raised.
    target_block_bytes = 4 * 1024 * 1024
    max_rows = max(sub, (target_block_bytes // (L * itemsize)) // sub * sub)
    TR = R if R <= max_rows else max_rows
    n_row_tiles = pl.cdiv(R, TR)

    # v7x has 2 TensorCores; give a "parallel" axis >= 2 steps so both get
    # work.  Costs at most one extra ~0.35us step on v5e/v6e (single-TC).
    if n_row_tiles * B < 2 and R >= 2 * sub:
        TR = min(R, _round_up(pl.cdiv(R, 2), sub))
        n_row_tiles = pl.cdiv(R, TR)

    x = inputs.reshape(B, N)
    e = emb.reshape(N)
    if N_pad != N:
        x = jnp.pad(x, ((0, 0), (0, N_pad - N)))
        e = jnp.pad(e, (0, N_pad - N))
    x = x.reshape(B, R, L)
    e = e.reshape(R, L)

    block_bytes = TR * L * itemsize
    live_bytes = 6 * block_bytes  # double-buffered x, out, emb
    vmem_limit = min(48 * 1024 * 1024,
                     max(32 * 1024 * 1024, int(live_bytes * 1.25)))

    out = pl.pallas_call(
        _add_pos_emb_kernel,
        out_shape=jax.ShapeDtypeStruct((B, R, L), dtype),
        grid_spec=pltpu.PrefetchScalarGridSpec(
            num_scalar_prefetch=0,
            # B innermost: the emb block index is constant across it, so
            # Pallas keeps the emb tile resident and skips re-DMA.
            grid=(n_row_tiles, B),
            in_specs=[
                pl.BlockSpec((None, TR, L), lambda r, b: (b, r, 0)),  # x
                pl.BlockSpec((TR, L), lambda r, b: (r, 0)),           # emb
            ],
            out_specs=pl.BlockSpec((None, TR, L), lambda r, b: (b, r, 0)),
        ),
        compiler_params=pltpu.CompilerParams(
            dimension_semantics=("parallel", "parallel"),
            vmem_limit_bytes=vmem_limit,
        ),
        cost_estimate=pl.CostEstimate(
            flops=B * N,
            transcendentals=0,
            bytes_accessed=2 * B * N * itemsize + N * itemsize,
        ),
        # TODO(synk): under jit, pass input_output_aliases={0: 0} to reuse the
        # activation HBM buffer (less allocator pressure; no bandwidth change).
        # Left off here because an eager reshape may alias the caller's array.
    )(x, e)

    out = out.reshape(B, N_pad)
    if N_pad != N:
        out = out[:, :N]
    return out.reshape(B, H, W, C)


if __name__ == "__main__":
    # Small, deterministic example shapes.
    B, H, W, hidden = 2, 16, 16, 32
    key = jax.random.PRNGKey(0)
    k_x, k_w, k_b = jax.random.split(key, 3)

    inputs = jax.random.normal(k_x, (B, H, W, hidden), dtype=jnp.float32)

    # Deterministic "Linear(4, hidden)" parameters.  PyTorch stores weight as
    # (hidden, 4); we keep the transposed (4, hidden) layout for the wrapper.
    weight = jax.random.normal(k_w, (4, hidden), dtype=jnp.float32) * 0.1
    bias = jax.random.normal(k_b, (hidden,), dtype=jnp.float32) * 0.1

    grid = build_grid((H, W))  # (1, H, W, 4)

    out = soft_position_embed(inputs, grid, weight, bias)
    out = jax.block_until_ready(out)

    # Sanity check against a pure-JAX reference of the PyTorch forward pass.
    ref = inputs + (grid.reshape(H * W, 4) @ weight + bias).reshape(1, H, W, hidden)
    assert out.shape == (B, H, W, hidden)
    assert jnp.allclose(out, ref, atol=1e-5, rtol=1e-5)

    print("KERNEL_OK")
</pallas_src>

<mosaic_0001>
module attributes {stable_mosaic.version = 11 : i64} {
  func.func @_add_pos_emb_kernel(%arg0: i32, %arg1: i32, %arg2: memref<1x4x2048xf32, #tpu.memory_space<vmem>>, %arg3: memref<4x2048xf32, #tpu.memory_space<vmem>>, %arg4: memref<1x4x2048xf32, #tpu.memory_space<vmem>>) attributes {dimension_semantics = [#tpu.dimension_semantics<parallel>, #tpu.dimension_semantics<parallel>], iteration_bounds = array<i64: 1, 2>, scalar_prefetch = 0 : i64, scratch_operands = 0 : i64, tpu.core_type = #tpu.core_type<tc>, window_params = [{transform_indices = @transform_0, window_bounds = array<i64: 1, 4, 2048>}, {transform_indices = @transform_1, window_bounds = array<i64: 4, 2048>}, {transform_indices = @transform_2, window_bounds = array<i64: 1, 4, 2048>}]} {
    %c0 = arith.constant 0 : index
    %c0_0 = arith.constant 0 : index
    %c0_1 = arith.constant 0 : index
    %0 = vector.load %arg2[%c0, %c0_0, %c0_1] : memref<1x4x2048xf32, #tpu.memory_space<vmem>>, vector<1x4x2048xf32>
    %1 = vector.shape_cast %0 : vector<1x4x2048xf32> to vector<4x2048xf32>
    %c0_2 = arith.constant 0 : index
    %c0_3 = arith.constant 0 : index
    %2 = vector.load %arg3[%c0_2, %c0_3] : memref<4x2048xf32, #tpu.memory_space<vmem>>, vector<4x2048xf32>
    %3 = arith.addf %1, %2 : vector<4x2048xf32>
    %c0_4 = arith.constant 0 : index
    %c0_5 = arith.constant 0 : index
    %c0_6 = arith.constant 0 : index
    %4 = vector.load %arg4[%c0_4, %c0_5, %c0_6] : memref<1x4x2048xf32, #tpu.memory_space<vmem>>, vector<1x4x2048xf32>
    %5 = vector.shape_cast %4 : vector<1x4x2048xf32> to vector<4x2048xf32>
    %6 = vector.shape_cast %3 : vector<4x2048xf32> to vector<1x4x2048xf32>
    tpu.vector_store %arg4[%c0_4, %c0_5, %c0_6], %6 {strides = array<i32>} : memref<1x4x2048xf32, #tpu.memory_space<vmem>>, vector<1x4x2048xf32>,
    return
  }
  func.func @transform_0(%arg0: i32, %arg1: i32) -> (i32, i32, i32) {
    %c0_i32 = arith.constant 0 : i32
    %c0_i32_0 = arith.constant 0 : i32
    return %arg1, %arg0, %c0_i32 : i32, i32, i32
  }
  func.func @transform_1(%arg0: i32, %arg1: i32) -> (i32, i32) {
    %c0_i32 = arith.constant 0 : i32
    %c0_i32_0 = arith.constant 0 : i32
    return %arg0, %c0_i32 : i32, i32
  }
  func.func @transform_2(%arg0: i32, %arg1: i32) -> (i32, i32, i32) {
    %c0_i32 = arith.constant 0 : i32
    %c0_i32_0 = arith.constant 0 : i32
    return %arg1, %arg0, %c0_i32 : i32, i32, i32
  }
}

</mosaic_0001>

<llo_original>
// kernel: tpu_custom_call.1
$region0: #{tpu_custom_call.1}
  #allocation0 [shape = 'u32[]', space=smem, size = 0x4, offset = 0x4, fixed_abs, tag = 'smem constant byte address 0x4 - core index']
  #allocation1 [shape = 'u32[144,128]{1,0:T(1,128)}', space=vmem, size = 0x12000, scoped, tag = 'internal scratch']
  %s0 = inlined_call_operand.hbm [shape: f32[2,4,2048], index: 0, kind: input, shape index: {}]
  %s1 = inlined_call_operand.hbm [shape: f32[4,2048], index: 1, kind: input, shape index: {}]
  %s2 = inlined_call_operand.hbm [shape: f32[2,4,2048], index: 2, kind: output, shape index: {}]
  %s3 = sld [smem:[#allocation0]]
  $region49: #{tpu_custom_call.1} parent=0
    _
  %s5 = ssub.s32 1, %s3
  %s6 = scalar_select 0, %s5, %s3
  $region1: #{tpu_custom_call.1} parent=0
    #allocation2 [shape = 'u8[65536]{0}', space=vmem, size = 0x10000, scoped, tag = 'input window, operand 0']
    #allocation3 [shape = 's32[2]{0}', space=sflag, size = 0x8, scoped, tag = 'scoped memory for tpu_custom_call.1']
    #allocation4 [shape = 's32[2]{0}', space=sflag, size = 0x8, scoped, tag = 'scoped memory for tpu_custom_call.1']
    #allocation5 [shape = 'u8[32768]{0}', space=vmem, size = 0x8000, scoped, tag = 'input window, operand 1, single buffered']
    #allocation6 [shape = 's32[1]{0}', space=sflag, size = 0x4, scoped, tag = 'scoped memory for tpu_custom_call.1']
    #allocation7 [shape = 'u8[65536]{0}', space=vmem, size = 0x10000, scoped, tag = 'output window, operand 0']
    %7 = vsyncpa [#allocation3], 0
    %s8 = scalar_lea.sflag [#allocation3], 1
    %9 = vsyncpa %s8, 0
    %10 = vsyncpa [#allocation6], 0
    %11 = vsyncpa [#allocation4], 0
    %s12 = scalar_lea.sflag [#allocation4], 1
    %13 = vsyncpa %s12, 0
    loop: start=0, step=1, limit=4
    $region2: #{tpu_custom_call.1} parent=1 // loop_pre_header
      _
    $region3: #{tpu_custom_call.1} parent=1 // loop_header
      %s15 = sphi 0, %s19
      %p16 = scmp.ge.s32.totalorder %s15, 4
      %s22 = sphi 0, %s34
      %s23 = sphi 0, %s30
      %s24 = sphi 0, %s22
      %s25 = sphi 0, %s23
      %s26 = sphi 0, %s24
      %s27 = sphi 0, %s25
      %s39 = sphi 0, %s41
      %s42 = sphi 0, %s39
      %s43 = sphi 0, %s42
      %s59 = sphi 0, %s43
      %s65 = sphi 0, %s67
      %s68 = sphi 0, %s65
      %s69 = sphi 0, %s68
      %s85 = sphi 0, %s69
      %s93 = sphi 0, %s95
      %s96 = sphi 0, %s93
      %s97 = sphi 0, %s96
      %s113 = sphi 0, %s97
    $region4: #{tpu_custom_call.1} parent=1 // loop_header_branch
      %18 = sbr.rel (%p16) target = $region8
    $region5: #{tpu_custom_call.1} parent=1 // loop_body
      %s20 = ssub.s32 %s15, 1
      %s21 = ssub.s32 %s15, 2
      %s28 = sadd.s32 1, %s23
      %p29 = scmp.ge.s32.totalorder %s28, 2
      %s30 = scalar_select %p29, 0, %s28
      %s31 = sadd.s32 1, %s22
      %s32 = scalar_select %p29, %s31, %s22
      %p33 = scmp.ge.s32.totalorder %s32, 1
      %s34 = scalar_select %p33, 0, %s32
      %s35 = ssub.s32 %s23, %s30
      %s36 = ssub.s32 %s22, %s34
      %s37 = sor.u32 %s35, %s36
      %p38 = scmp.eq.s32.totalorder %s37, 0
      %s40 = sadd.s32 %s39, 1
      %s41 = scalar_select %p38, %s39, %s40
      %p44 = pneg %p38
      %p45 = scmp.eq.s32.totalorder %s15, 1
      %p46 = por %p44, %p45
      %p47 = scmp.ne.s32.totalorder %s39, %s42
      %p48 = scmp.eq.s32.totalorder %s15, 0
      %p49 = por %p47, %p48
      %p50 = scmp.ne.s32.totalorder %s39, %s42
      %p51 = scmp.eq.s32.totalorder %s20, 1
      %p52 = por %p50, %p51
      %p53 = scmp.ne.s32.totalorder %s42, %s43
      %p54 = scmp.eq.s32.totalorder %s20, 0
      %p55 = por %p53, %p54
      %p56 = scmp.ne.s32.totalorder %s42, %s43
      %p57 = scmp.eq.s32.totalorder %s21, 1
      %p58 = por %p56, %p57
      %p60 = scmp.ne.s32.totalorder %s43, %s59
      %p61 = scmp.eq.s32.totalorder %s21, 0
      %p62 = por %p60, %p61
      %s63 = ssub.s32 %s22, %s34
      %p64 = scmp.eq.s32.totalorder %s63, 0
      %s66 = sadd.s32 %s65, 1
      %s67 = scalar_select %p64, %s65, %s66
      %p70 = pneg %p64
      %p71 = scmp.eq.s32.totalorder %s15, 1
      %p72 = por %p70, %p71
      %p73 = scmp.ne.s32.totalorder %s65, %s68
      %p74 = scmp.eq.s32.totalorder %s15, 0
      %p75 = por %p73, %p74
      %p76 = scmp.ne.s32.totalorder %s65, %s68
      %p77 = scmp.eq.s32.totalorder %s20, 1
      %p78 = por %p76, %p77
      %p79 = scmp.ne.s32.totalorder %s68, %s69
      %p80 = scmp.eq.s32.totalorder %s20, 0
      %p81 = por %p79, %p80
      %p82 = scmp.ne.s32.totalorder %s68, %s69
      %p83 = scmp.eq.s32.totalorder %s21, 1
      %p84 = por %p82, %p83
      %p86 = scmp.ne.s32.totalorder %s69, %s85
      %p87 = scmp.eq.s32.totalorder %s21, 0
      %p88 = por %p86, %p87
      %s89 = ssub.s32 %s23, %s30
      %s90 = ssub.s32 %s22, %s34
      %s91 = sor.u32 %s89, %s90
      %p92 = scmp.eq.s32.totalorder %s91, 0
      %s94 = sadd.s32 %s93, 1
      %s95 = scalar_select %p92, %s93, %s94
      %p98 = pneg %p92
      %p99 = scmp.eq.s32.totalorder %s15, 1
      %p100 = por %p98, %p99
      %p101 = scmp.ne.s32.totalorder %s93, %s96
      %p102 = scmp.eq.s32.totalorder %s15, 0
      %p103 = por %p101, %p102
      %p104 = scmp.ne.s32.totalorder %s93, %s96
      %p105 = scmp.eq.s32.totalorder %s20, 1
      %p106 = por %p104, %p105
      %p107 = scmp.ne.s32.totalorder %s96, %s97
      %p108 = scmp.eq.s32.totalorder %s20, 0
      %p109 = por %p107, %p108
      %p110 = scmp.ne.s32.totalorder %s96, %s97
      %p111 = scmp.eq.s32.totalorder %s21, 1
      %p112 = por %p110, %p111
      %p114 = scmp.ne.s32.totalorder %s97, %s113
      %p115 = scmp.eq.s32.totalorder %s21, 0
      %p116 = por %p114, %p115
      %p117 = scmp.le.s32.totalorder 1, %s15
      %p118 = scmp.lt.s32.totalorder %s15, 3
      %p119 = pnand %p117, %p118
      %p120 = pneg %p119
      // Predicated region
      $region9: #{tpu_custom_call.1} parent=5 // pred_check
        _
      $region10: #{tpu_custom_call.1} parent=5 // pred_check_branch
        %122 = sbr.rel (%p119) target = $region12
      $region11: #{tpu_custom_call.1} parent=5 // pred_region
        %s123 = ssub.s32 %s15, 1
        // Predicated region
        $region13: #{tpu_custom_call.1} parent=11 // pred_check
          %p124 = pneg %p81
        $region14: #{tpu_custom_call.1} parent=11 // pred_check_branch
          %126 = sbr.rel (%p124) target = $region16
        $region15: #{tpu_custom_call.1} parent=11 // pred_region
          %s128 = ssub.s32 1024, 1024
          %129 = vsyncadd [#allocation6], %s128
          %s130 = smul.addr %s24, 16
          %s131 = smul.addr %s130, 64
          %s132 = scalar_lea.hbm %s1, %s131
          %s134 = sshll.u32 [#allocation5], 4
          %s135 = int_to_ptr.vmem [resolvable:$true] %s134
          %137 = dma.hbm_to_vmem [thread:$0]  %s132, 1024, %s135, [#allocation6]
        $region16: #{tpu_custom_call.1} parent=11 // pred_fallthru
          _
      $region12: #{tpu_custom_call.1} parent=5 // pred_fallthru
        _
      %p138 = scmp.lt.s32.totalorder %s15, 2
      // Predicated region
      $region17: #{tpu_custom_call.1} parent=5 // pred_check
        %p139 = pneg %p138
      $region18: #{tpu_custom_call.1} parent=5 // pred_check_branch
        %141 = sbr.rel (%p139) target = $region20
      $region19: #{tpu_custom_call.1} parent=5 // pred_region
        // Predicated region
        $region21: #{tpu_custom_call.1} parent=19 // pred_check
          %p142 = pneg %p49
        $region22: #{tpu_custom_call.1} parent=19 // pred_check_branch
          %144 = sbr.rel (%p142) target = $region24
        $region23: #{tpu_custom_call.1} parent=19 // pred_region
          %s145 = sand.u32 %s39, 1
          %s146 = scalar_lea.sflag [#allocation3], %s145
          %s147 = sand.u32 %s39, 1
          %s148 = smul.addr %s147, 64
          %s149 = scalar_lea.vmem [#allocation2], %s148
          %s151 = ssub.s32 1024, 1024
          %152 = vsyncadd %s146, %s151
          %s153 = smul.addr %s22, 16
          %s154 = smul.addr %s23, 16
          %s155 = sadd.s32 %s153, %s154
          %s156 = smul.addr %s155, 64
          %s157 = scalar_lea.hbm %s0, %s156
          %s159 = sshll.u32 %s149, 4
          %s160 = int_to_ptr.vmem [resolvable:$true] %s159
          %162 = dma.hbm_to_vmem [thread:$0]  %s157, 1024, %s160, %s146
        $region24: #{tpu_custom_call.1} parent=19 // pred_fallthru
          _
      $region20: #{tpu_custom_call.1} parent=5 // pred_fallthru
        _
      %p163 = scmp.le.s32.totalorder 1, %s15
      %p164 = scmp.lt.s32.totalorder %s15, 3
      %p165 = pnand %p163, %p164
      %p166 = pneg %p165
      // Predicated region
      $region25: #{tpu_custom_call.1} parent=5 // pred_check
        _
      $region26: #{tpu_custom_call.1} parent=5 // pred_check_branch
        %168 = sbr.rel (%p165) target = $region28
      $region27: #{tpu_custom_call.1} parent=5 // pred_region
        %s169 = ssub.s32 %s15, 1
        %s170 = sand.u32 %s42, 1
        %s171 = scalar_lea.sflag [#allocation3], %s170
        %s172 = sand.u32 %s42, 1
        %s173 = smul.addr %s172, 64
        %s174 = scalar_lea.vmem [#allocation2], %s173
        // Predicated region
        $region29: #{tpu_custom_call.1} parent=27 // pred_check
          %p175 = pneg %p55
        $region30: #{tpu_custom_call.1} parent=27 // pred_check_branch
          %177 = sbr.rel (%p175) target = $region32
        $region31: #{tpu_custom_call.1} parent=27 // pred_region
          %178 = dma.done %s171, 1024
        $region32: #{tpu_custom_call.1} parent=27 // pred_fallthru
          _
        // Predicated region
        $region33: #{tpu_custom_call.1} parent=27 // pred_check
          %p179 = pneg %p81
        $region34: #{tpu_custom_call.1} parent=27 // pred_check_branch
          %181 = sbr.rel (%p179) target = $region36
        $region35: #{tpu_custom_call.1} parent=27 // pred_region
          %182 = dma.done [#allocation6], 1024
        $region36: #{tpu_custom_call.1} parent=27 // pred_fallthru
          _
        %s183 = sand.u32 %s42, 1
        %s184 = scalar_lea.sflag [#allocation3], %s183
        %s185 = sand.u32 %s42, 1
        %s186 = smul.addr %s185, 64
        %s187 = scalar_lea.vmem [#allocation2], %s186
        %p188 = pneg %p55
        %p189 = pneg %p52
        %p190 = pneg %p81
        %p191 = pneg %p78
        %p192 = pneg %p109
        %p193 = pneg %p106
        %s194 = sand.u32 %s96, 1
        %s195 = scalar_lea.sflag [#allocation4], %s194
        %s196 = sand.u32 %s96, 1
        %s197 = smul.addr %s196, 64
        %s198 = scalar_lea.vmem [#allocation7], %s197
        %v199 = vld [vmem:[%s174] sm:$0xff]
        %v200 = vld [vmem:[%s174 + $0x8] sm:$0xff]
        %v201 = vld [vmem:[%s174 + $0x10] sm:$0xff]
        %v202 = vld [vmem:[%s174 + $0x18] sm:$0xff]
        %v203 = vld [vmem:[%s174 + $0x20] sm:$0xff]
        %v204 = vld [vmem:[%s174 + $0x28] sm:$0xff]
        %v205 = vld [vmem:[%s174 + $0x30] sm:$0xff]
        %v206 = vld [vmem:[%s174 + $0x38] sm:$0xff]
        %v207 = vld [vmem:[#allocation5] sm:$0xff]
        %v208 = vld [vmem:[#allocation5 + $0x8] sm:$0xff]
        %v209 = vld [vmem:[#allocation5 + $0x10] sm:$0xff]
        %v210 = vld [vmem:[#allocation5 + $0x18] sm:$0xff]
        %v211 = vld [vmem:[#allocation5 + $0x20] sm:$0xff]
        %v212 = vld [vmem:[#allocation5 + $0x28] sm:$0xff]
        %v213 = vld [vmem:[#allocation5 + $0x30] sm:$0xff]
        %v214 = vld [vmem:[#allocation5 + $0x38] sm:$0xff]
        %v215 = vadd.f32 %v199, %v207
        %v216 = vadd.f32 %v200, %v208
        %v217 = vadd.f32 %v201, %v209
        %v218 = vadd.f32 %v202, %v210
        %v219 = vadd.f32 %v203, %v211
        %v220 = vadd.f32 %v204, %v212
        %v221 = vadd.f32 %v205, %v213
        %v222 = vadd.f32 %v206, %v214
        %223 = vst [vmem:[%s198] sm:$0xff] %v215
        %224 = vst [vmem:[%s198 + $0x8] sm:$0xff] %v216
        %225 = vst [vmem:[%s198 + $0x10] sm:$0xff] %v217
        %226 = vst [vmem:[%s198 + $0x18] sm:$0xff] %v218
        %227 = vst [vmem:[%s198 + $0x20] sm:$0xff] %v219
        %228 = vst [vmem:[%s198 + $0x28] sm:$0xff] %v220
        %229 = vst [vmem:[%s198 + $0x30] sm:$0xff] %v221
        %230 = vst [vmem:[%s198 + $0x38] sm:$0xff] %v222
        %s231 = sand.u32 %s96, 1
        %s232 = scalar_lea.sflag [#allocation4], %s231
        %s233 = sand.u32 %s96, 1
        %s234 = smul.addr %s233, 64
        %s235 = scalar_lea.vmem [#allocation7], %s234
        // Predicated region
        $region37: #{tpu_custom_call.1} parent=27 // pred_check
          %p236 = pneg %p106
        $region38: #{tpu_custom_call.1} parent=27 // pred_check_branch
          %238 = sbr.rel (%p236) target = $region40
        $region39: #{tpu_custom_call.1} parent=27 // pred_region
          %s240 = ssub.s32 1024, 1024
          %241 = vsyncadd %s232, %s240
          %s242 = smul.addr %s24, 16
          %s243 = smul.addr %s25, 16
          %s244 = sadd.s32 %s242, %s243
          %s245 = smul.addr %s244, 64
          %s246 = scalar_lea.hbm %s2, %s245
          %s248 = sshll.u32 %s235, 4
          %s249 = int_to_ptr.vmem [resolvable:$true] %s248
          %251 = dma.vmem_to_hbm [thread:$0]  %s249, 1024, %s246, %s232
        $region40: #{tpu_custom_call.1} parent=27 // pred_fallthru
          _
      $region28: #{tpu_custom_call.1} parent=5 // pred_fallthru
        _
      %p252 = scmp.le.s32.totalorder 2, %s15
      // Predicated region
      $region41: #{tpu_custom_call.1} parent=5 // pred_check
        %p253 = pneg %p252
      $region42: #{tpu_custom_call.1} parent=5 // pred_check_branch
        %255 = sbr.rel (%p253) target = $region44
      $region43: #{tpu_custom_call.1} parent=5 // pred_region
        %s256 = ssub.s32 %s15, 2
        // Predicated region
        $region45: #{tpu_custom_call.1} parent=43 // pred_check
          %p257 = pneg %p112
        $region46: #{tpu_custom_call.1} parent=43 // pred_check_branch
          %259 = sbr.rel (%p257) target = $region48
        $region47: #{tpu_custom_call.1} parent=43 // pred_region
          %s260 = sand.u32 %s97, 1
          %s261 = scalar_lea.sflag [#allocation4], %s260
          %s262 = sand.u32 %s97, 1
          %s263 = smul.addr %s262, 64
          %s264 = scalar_lea.vmem [#allocation7], %s263
          %265 = dma.done %s261, 1024
        $region48: #{tpu_custom_call.1} parent=43 // pred_fallthru
          _
      $region44: #{tpu_custom_call.1} parent=5 // pred_fallthru
        _
    $region6: #{tpu_custom_call.1} parent=1 // loop_footer
      %s19 = sadd.s32 1, %s15
    $region7: #{tpu_custom_call.1} parent=1 // loop_footer_branch
      %14 = sbr.rel target = $region3
    $region8: #{tpu_custom_call.1} parent=1 // loop_exit
      _
    %266 = vsyncpa [#allocation3], 1
    %s267 = scalar_lea.sflag [#allocation3], 1
    %268 = vsyncpa %s267, 1
    %269 = vsyncpa [#allocation6], 1
    %270 = vsyncpa [#allocation4], 1
    %s271 = scalar_lea.sflag [#allocation4], 1
    %272 = vsyncpa %s271, 1

</llo_original>
